<compile_context>
chip_gen: v6e
topology: v6e:2x2x1
jax: 0.10.0
libtpu: 0.0.40
codegen_flags: <defaults>
</compile_context>

<pallas_src>
import functools
import math

import jax
import jax.numpy as jnp
from jax.experimental import pallas as pl
from jax.experimental.pallas import tpu as pltpu


def _round_up(x: int, m: int) -> int:
    return ((x + m - 1) // m) * m


def _cdiv(a: int, b: int) -> int:
    return -(-a // b)


def _vmem_capacity_bytes() -> int:
    """Physical VMEM per TensorCore; conservative fallback if query fails."""
    try:
        return int(pltpu.get_tpu_info().vmem_capacity_bytes)
    except Exception:
        return 64 << 20  # v7x per-TC size; safe lower bound for v5e/v6e too.


def _spec(shape, index_map, buffers=None):
    """BlockSpec with optional pipeline depth; degrades gracefully if the
    pipeline_mode kwarg / pl.Buffered is unavailable."""
    if buffers is None:
        return pl.BlockSpec(shape, index_map)
    try:
        return pl.BlockSpec(shape, index_map, pipeline_mode=pl.Buffered(buffers))
    except (TypeError, AttributeError):
        return pl.BlockSpec(shape, index_map)


def _row_tiling(rows: int, tm: int):
    """Row tile that bounds padding waste to ~15 rows per tile."""
    n_tiles = max(1, _cdiv(rows, tm))
    tm_eff = _round_up(_cdiv(rows, n_tiles), 16)
    return tm_eff, n_tiles, tm_eff * n_tiles


# --------------------------------------------------------------------------
# Kernels
# --------------------------------------------------------------------------
def ffn_kernel_resident(x_ref, w1_ref, b1_ref, w2_ref, b2_ref, o_ref):
    # x: (TM, Hp) bf16; W1/W2: (Hp, Hp) bf16 (VMEM-resident); b1/b2: (1, Hp) f32.
    h = jnp.dot(x_ref[...], w1_ref[...], preferred_element_type=jnp.float32)
    h = jnp.maximum(h + b1_ref[...], 0.0)          # bias + ReLU in f32
    # dropout: eval-mode identity.
    o = jnp.dot(h.astype(w2_ref.dtype), w2_ref[...],
                preferred_element_type=jnp.float32)
    o_ref[...] = (o + b2_ref[...]).astype(o_ref.dtype)


def ffn_kernel_tiled(x_ref, w1_ref, b1_ref, w2_ref, b2_ref, o_ref, acc_ref):
    # Hidden dim tiled: W1 panel (Hp, TN), W2 panel (TN, Hp); accumulate in f32.
    n = pl.program_id(1)

    @pl.when(n == 0)
    def _():
        acc_ref[...] = jnp.zeros_like(acc_ref)

    h = jnp.dot(x_ref[...], w1_ref[...], preferred_element_type=jnp.float32)
    h = jnp.maximum(h + b1_ref[...], 0.0)          # bias + ReLU in f32
    # dropout: eval-mode identity.
    acc_ref[...] += jnp.dot(h.astype(w2_ref.dtype), w2_ref[...],
                            preferred_element_type=jnp.float32)

    @pl.when(n == pl.num_programs(1) - 1)
    def _():
        o_ref[...] = (acc_ref[...] + b2_ref[...]).astype(o_ref.dtype)


# --------------------------------------------------------------------------
# Wrapper
# --------------------------------------------------------------------------
def prepare_ffn_params(w1, b1, w2, b2):
    """One-time pad (hidden -> multiple of 128) + bf16 cast of the parameters.

    Hoisted out of the per-call path so each forward call does not pay an
    extra HBM round-trip re-padding / re-casting the weights.  Zero padding
    preserves semantics: padded hidden columns see zero weight/bias, ReLU(0)=0,
    and contribute nothing through the zero rows of W2.
    """
    H = w1.shape[0]
    Hp = max(128, _round_up(H, 128))
    w1b = w1.astype(jnp.bfloat16)
    w2b = w2.astype(jnp.bfloat16)
    b1f = b1.astype(jnp.float32)
    b2f = b2.astype(jnp.float32)
    if Hp == H:
        return w1b, b1f.reshape(1, Hp), w2b, b2f.reshape(1, Hp)
    w1p = jnp.zeros((Hp, Hp), jnp.bfloat16).at[:H, :H].set(w1b)
    w2p = jnp.zeros((Hp, Hp), jnp.bfloat16).at[:H, :H].set(w2b)
    b1p = jnp.zeros((1, Hp), jnp.float32).at[0, :H].set(b1f)
    b2p = jnp.zeros((1, Hp), jnp.float32).at[0, :H].set(b2f)
    return w1p, b1p, w2p, b2p


@functools.partial(jax.jit, static_argnames=("tm", "tn", "force_hidden_tiling"))
def ffn_forward(x, w1p, b1p, w2p, b2p, *, tm=512, tn=None,
                force_hidden_tiling=False):
    """x: (B, S, H) float32.  w*p / b*p: outputs of prepare_ffn_params."""
    B, S, H = x.shape
    rows = B * S
    Hp = w1p.shape[0]

    vmem_cap = _vmem_capacity_bytes()
    budget = int(0.70 * vmem_cap)      # headroom for Mosaic internals / spills

    # ---- Corrected VMEM accounting for the resident-weight path -----------
    def resident_vmem(tm_, xbuf_):
        return (2 * Hp * Hp * 2            # W1 + W2 bf16, single-buffered
                + 2 * Hp * 4               # b1 + b2 f32, single-buffered
                + xbuf_ * tm_ * Hp * 2     # x tile pipeline buffers (bf16)
                + 2 * tm_ * Hp * 4         # out tile, double-buffered (f32)
                + tm_ * Hp * (4 + 2))      # in-kernel h (f32) + bf16 copy

    # v5e/v6e (128 MiB VMEM): grow the row tile while the working set fits ->
    # fewer grid steps, longer uninterrupted MXU runs per weight residency.
    while (not force_hidden_tiling and tm < 2048 and rows >= 2 * tm
           and resident_vmem(_row_tiling(rows, 2 * tm)[0], 2) <= budget):
        tm *= 2
    TM, n_row_tiles, rows_pad = _row_tiling(rows, tm)

    # Mem-bound small-Hp regime: a 3rd x buffer is cheap and hides DMA latency.
    xbuf = 3 if (Hp <= 512 and n_row_tiles >= 3) else 2
    use_tiled = force_hidden_tiling or resident_vmem(TM, xbuf) > budget

    if use_tiled:
        # ---- Hidden-dim tiled path (v7x large-H, or huge H anywhere) ------
        TN = tn if tn is not None else min(512, Hp)
        TN = max(128, _round_up(TN, 128))
        while Hp % TN != 0:
            TN -= 128

        def tiled_vmem(tm_):
            return (2 * Hp * TN * 2 + 2 * TN * Hp * 2   # W1/W2 panels, 2-buf
                    + 2 * TN * 4 + Hp * 4               # b1 panel (2-buf), b2
                    + 2 * tm_ * Hp * 2                  # x tile, 2-buf
                    + 2 * tm_ * Hp * 4                  # out tile, 2-buf (f32)
                    + tm_ * Hp * 4                      # f32 accumulator
                    + tm_ * TN * (4 + 2))               # in-kernel h + bf16

        while tiled_vmem(TM) > budget and TM > 16:
            tm = max(16, tm // 2)
            TM, n_row_tiles, rows_pad = _row_tiling(rows, tm)
        n_col_tiles = Hp // TN
        vmem_needed = tiled_vmem(TM)
    else:
        vmem_needed = resident_vmem(TM, xbuf)

    # ---- Pad / cast activations (skipped when already aligned) ------------
    x2d = x.reshape(rows, H).astype(jnp.bfloat16)
    if rows_pad != rows or Hp != H:
        x2d = jnp.zeros((rows_pad, Hp), jnp.bfloat16).at[:rows, :H].set(x2d)

    flops = 2 * 2 * rows_pad * Hp * Hp      # two matmuls
    compiler_kwargs = {}
    vmem_limit = min(int(vmem_needed * 1.25) + (1 << 20), int(0.90 * vmem_cap))
    if vmem_limit > (32 << 20):             # raise above the scoped default
        compiler_kwargs["vmem_limit_bytes"] = vmem_limit

    if not use_tiled:
        bytes_accessed = (rows_pad * Hp * 2 + 2 * Hp * Hp * 2 + 2 * Hp * 4
                          + rows_pad * Hp * 4)
        out2d = pl.pallas_call(
            ffn_kernel_resident,
            out_shape=jax.ShapeDtypeStruct((rows_pad, Hp), jnp.float32),
            grid_spec=pltpu.PrefetchScalarGridSpec(
                num_scalar_prefetch=0,
                grid=(n_row_tiles,),
                in_specs=[
                    _spec((TM, Hp), lambda i: (i, 0),
                          buffers=(xbuf if xbuf != 2 else None)),
                    # Constant-index blocks: single buffer, stay resident.
                    _spec((Hp, Hp), lambda i: (0, 0), buffers=1),   # W1
                    _spec((1, Hp), lambda i: (0, 0), buffers=1),    # b1
                    _spec((Hp, Hp), lambda i: (0, 0), buffers=1),   # W2
                    _spec((1, Hp), lambda i: (0, 0), buffers=1),    # b2
                ],
                out_specs=pl.BlockSpec((TM, Hp), lambda i: (i, 0)),
            ),
            compiler_params=pltpu.CompilerParams(
                dimension_semantics=("parallel",), **compiler_kwargs),
            cost_estimate=pl.CostEstimate(
                flops=flops, transcendentals=0, bytes_accessed=bytes_accessed),
        )(x2d, w1p, b1p, w2p, b2p)
    else:
        bytes_accessed = (rows_pad * Hp * 2
                          + n_row_tiles * (2 * Hp * Hp * 2 + Hp * 4) + Hp * 4
                          + rows_pad * Hp * 4)
        out2d = pl.pallas_call(
            ffn_kernel_tiled,
            out_shape=jax.ShapeDtypeStruct((rows_pad, Hp), jnp.float32),
            grid_spec=pltpu.PrefetchScalarGridSpec(
                num_scalar_prefetch=0,
                grid=(n_row_tiles, n_col_tiles),
                in_specs=[
                    pl.BlockSpec((TM, Hp), lambda i, n: (i, 0)),   # x row tile
                    pl.BlockSpec((Hp, TN), lambda i, n: (0, n)),   # W1 panel
                    pl.BlockSpec((1, TN), lambda i, n: (0, n)),    # b1 panel
                    pl.BlockSpec((TN, Hp), lambda i, n: (n, 0)),   # W2 panel
                    _spec((1, Hp), lambda i, n: (0, 0), buffers=1),  # b2
                ],
                out_specs=pl.BlockSpec((TM, Hp), lambda i, n: (i, 0)),
                scratch_shapes=[pltpu.VMEM((TM, Hp), jnp.float32)],
            ),
            compiler_params=pltpu.CompilerParams(
                dimension_semantics=("parallel", "arbitrary"),
                **compiler_kwargs),
            cost_estimate=pl.CostEstimate(
                flops=flops, transcendentals=0, bytes_accessed=bytes_accessed),
        )(x2d, w1p, b1p, w2p, b2p)

    # Padded rows/columns carry garbage/zeros respectively; slice them off.
    return out2d[:rows, :H].reshape(B, S, H).astype(x.dtype)


def ffn_reference(x, w1, b1, w2, b2):
    """Pure-JAX reference mirroring the kernel's bf16-operand / f32-accum numerics."""
    xb = x.astype(jnp.bfloat16).astype(jnp.float32)
    w1b = w1.astype(jnp.bfloat16).astype(jnp.float32)
    w2b = w2.astype(jnp.bfloat16).astype(jnp.float32)
    h = jnp.maximum(xb @ w1b + b1.astype(jnp.float32), 0.0)
    hb = h.astype(jnp.bfloat16).astype(jnp.float32)
    return hb @ w2b + b2.astype(jnp.float32)


if __name__ == "__main__":
    key = jax.random.PRNGKey(0)

    # --- Primary check: module-consistent toy shapes (hidden_size=32) ------
    # NOTE: at this toy size the kernel is per-step-overhead bound; the tiling
    # only pays off at realistic (rows, H).
    B, S, H = 2, 8, 32
    kx, k1, k2, k3, k4, k5 = jax.random.split(key, 6)
    x = jax.random.normal(kx, (B, S, H), dtype=jnp.float32)
    bound = 1.0 / math.sqrt(H)
    w1 = jax.random.uniform(k1, (H, H), jnp.float32, -bound, bound)  # (in, out)
    b1 = jax.random.uniform(k2, (H,), jnp.float32, -bound, bound)
    w2 = jax.random.uniform(k3, (H, H), jnp.float32, -bound, bound)  # (in, out)
    b2 = jax.random.uniform(k4, (H,), jnp.float32, -bound, bound)

    params = prepare_ffn_params(w1, b1, w2, b2)   # hoisted: pad/cast once
    out = ffn_forward(x, *params)
    jax.block_until_ready(out)

    ref = ffn_reference(x, w1, b1, w2, b2)
    assert out.shape == (B, S, H)
    assert jnp.allclose(out, ref, atol=2e-3, rtol=2e-3), float(
        jnp.max(jnp.abs(out - ref)))

    # --- Secondary check: exercise the hidden-dim-tiled accumulator path ---
    H2 = 256
    kx2, k6, k7, k8, k9 = jax.random.split(k5, 5)
    x2 = jax.random.normal(kx2, (B, S, H2), dtype=jnp.float32)
    bound2 = 1.0 / math.sqrt(H2)
    w1t = jax.random.uniform(k6, (H2, H2), jnp.float32, -bound2, bound2)
    b1t = jax.random.uniform(k7, (H2,), jnp.float32, -bound2, bound2)
    w2t = jax.random.uniform(k8, (H2, H2), jnp.float32, -bound2, bound2)
    b2t = jax.random.uniform(k9, (H2,), jnp.float32, -bound2, bound2)
    params2 = prepare_ffn_params(w1t, b1t, w2t, b2t)
    out2 = ffn_forward(x2, *params2, tn=128, force_hidden_tiling=True)
    jax.block_until_ready(out2)
    ref2 = ffn_reference(x2, w1t, b1t, w2t, b2t)
    assert out2.shape == (B, S, H2)
    assert jnp.allclose(out2, ref2, atol=1e-2, rtol=1e-2), float(
        jnp.max(jnp.abs(out2 - ref2)))

    print("KERNEL_OK")
</pallas_src>

<mosaic_0001>
module attributes {stable_mosaic.version = 11 : i64} {
  func.func @ffn_kernel_resident(%arg0: i32, %arg1: memref<16x128xbf16, #tpu.memory_space<vmem>>, %arg2: memref<128x128xbf16, #tpu.memory_space<vmem>>, %arg3: memref<1x128xf32, #tpu.memory_space<vmem>>, %arg4: memref<128x128xbf16, #tpu.memory_space<vmem>>, %arg5: memref<1x128xf32, #tpu.memory_space<vmem>>, %arg6: memref<16x128xf32, #tpu.memory_space<vmem>>) attributes {dimension_semantics = [#tpu.dimension_semantics<parallel>], iteration_bounds = array<i64: 1>, scalar_prefetch = 0 : i64, scratch_operands = 0 : i64, tpu.core_type = #tpu.core_type<tc>, window_params = [{transform_indices = @transform_0, window_bounds = array<i64: 16, 128>}, {pipeline_mode = #tpu.pipeline_mode<synchronous>, transform_indices = @transform_1, window_bounds = array<i64: 128, 128>}, {pipeline_mode = #tpu.pipeline_mode<synchronous>, transform_indices = @transform_2, window_bounds = array<i64: 1, 128>}, {pipeline_mode = #tpu.pipeline_mode<synchronous>, transform_indices = @transform_3, window_bounds = array<i64: 128, 128>}, {pipeline_mode = #tpu.pipeline_mode<synchronous>, transform_indices = @transform_4, window_bounds = array<i64: 1, 128>}, {transform_indices = @transform_5, window_bounds = array<i64: 16, 128>}]} {
    %c0 = arith.constant 0 : index
    %c0_0 = arith.constant 0 : index
    %0 = vector.load %arg1[%c0, %c0_0] : memref<16x128xbf16, #tpu.memory_space<vmem>>, vector<16x128xbf16>
    %c0_1 = arith.constant 0 : index
    %c0_2 = arith.constant 0 : index
    %1 = vector.load %arg2[%c0_1, %c0_2] : memref<128x128xbf16, #tpu.memory_space<vmem>>, vector<128x128xbf16>
    %cst = arith.constant dense<0.000000e+00> : vector<16x128xf32>
    %2 = tpu.matmul %0, %1, %cst {dimension_numbers = #tpu.dot_dimension_numbers<[1], [0], [0], [1], [0, 0, 1, 1], [], []>} : vector<16x128xbf16>, vector<128x128xbf16>, vector<16x128xf32> -> vector<16x128xf32>
    %c0_3 = arith.constant 0 : index
    %c0_4 = arith.constant 0 : index
    %3 = vector.load %arg3[%c0_3, %c0_4] : memref<1x128xf32, #tpu.memory_space<vmem>>, vector<1x128xf32>
    %4 = vector.broadcast %3 : vector<1x128xf32> to vector<16x128xf32>
    %5 = arith.addf %2, %4 : vector<16x128xf32>
    %cst_5 = arith.constant 0.000000e+00 : f32
    %6 = vector.broadcast %cst_5 : f32 to vector<16x128xf32>
    %7 = arith.maximumf %5, %6 : vector<16x128xf32>
    %8 = arith.truncf %7 : vector<16x128xf32> to vector<16x128xbf16>
    %c0_6 = arith.constant 0 : index
    %c0_7 = arith.constant 0 : index
    %9 = vector.load %arg4[%c0_6, %c0_7] : memref<128x128xbf16, #tpu.memory_space<vmem>>, vector<128x128xbf16>
    %cst_8 = arith.constant dense<0.000000e+00> : vector<16x128xf32>
    %10 = tpu.matmul %8, %9, %cst_8 {dimension_numbers = #tpu.dot_dimension_numbers<[1], [0], [0], [1], [0, 0, 1, 1], [], []>} : vector<16x128xbf16>, vector<128x128xbf16>, vector<16x128xf32> -> vector<16x128xf32>
    %c0_9 = arith.constant 0 : index
    %c0_10 = arith.constant 0 : index
    %11 = vector.load %arg5[%c0_9, %c0_10] : memref<1x128xf32, #tpu.memory_space<vmem>>, vector<1x128xf32>
    %12 = vector.broadcast %11 : vector<1x128xf32> to vector<16x128xf32>
    %13 = arith.addf %10, %12 : vector<16x128xf32>
    %c0_11 = arith.constant 0 : index
    %c0_12 = arith.constant 0 : index
    %14 = vector.load %arg6[%c0_11, %c0_12] : memref<16x128xf32, #tpu.memory_space<vmem>>, vector<16x128xf32>
    tpu.vector_store %arg6[%c0_11, %c0_12], %13 {strides = array<i32>} : memref<16x128xf32, #tpu.memory_space<vmem>>, vector<16x128xf32>,
    return
  }
  func.func @transform_0(%arg0: i32) -> (i32, i32) {
    %c0_i32 = arith.constant 0 : i32
    %c0_i32_0 = arith.constant 0 : i32
    return %arg0, %c0_i32 : i32, i32
  }
  func.func @transform_1(%arg0: i32) -> (i32, i32) {
    %c0_i32 = arith.constant 0 : i32
    %c0_i32_0 = arith.constant 0 : i32
    %c0_i32_1 = arith.constant 0 : i32
    return %c0_i32, %c0_i32_0 : i32, i32
  }
  func.func @transform_2(%arg0: i32) -> (i32, i32) {
    %c0_i32 = arith.constant 0 : i32
    %c0_i32_0 = arith.constant 0 : i32
    %c0_i32_1 = arith.constant 0 : i32
    return %c0_i32, %c0_i32_0 : i32, i32
  }
  func.func @transform_3(%arg0: i32) -> (i32, i32) {
    %c0_i32 = arith.constant 0 : i32
    %c0_i32_0 = arith.constant 0 : i32
    %c0_i32_1 = arith.constant 0 : i32
    return %c0_i32, %c0_i32_0 : i32, i32
  }
  func.func @transform_4(%arg0: i32) -> (i32, i32) {
    %c0_i32 = arith.constant 0 : i32
    %c0_i32_0 = arith.constant 0 : i32
    %c0_i32_1 = arith.constant 0 : i32
    return %c0_i32, %c0_i32_0 : i32, i32
  }
  func.func @transform_5(%arg0: i32) -> (i32, i32) {
    %c0_i32 = arith.constant 0 : i32
    %c0_i32_0 = arith.constant 0 : i32
    return %arg0, %c0_i32 : i32, i32
  }
}

</mosaic_0001>

<llo_original>
// kernel: ffn_forward.1
$region0: #{ffn_forward.1}
  #allocation0 [shape = 'u32[]', space=smem, size = 0x4, offset = 0x4, fixed_abs, tag = 'smem constant byte address 0x4 - core index']
  #allocation1 [shape = 'u32[144,128]{1,0:T(1,128)}', space=vmem, size = 0x12000, scoped, tag = 'internal scratch']
  %s0 = inlined_call_operand.vmem [shape: bf16[16,128], index: 0, kind: input, shape index: {}]
  %s1 = inlined_call_operand.hbm [shape: bf16[128,128], index: 1, kind: input, shape index: {}]
  %s2 = inlined_call_operand.vmem [shape: f32[1,128], index: 2, kind: input, shape index: {}]
  %s3 = inlined_call_operand.hbm [shape: bf16[128,128], index: 3, kind: input, shape index: {}]
  %s4 = inlined_call_operand.vmem [shape: f32[1,128], index: 4, kind: input, shape index: {}]
  %s5 = inlined_call_operand.vmem [shape: f32[16,128], index: 5, kind: output, shape index: {}]
  %s6 = sld [smem:[#allocation0]]
  $region38: #{ffn_forward.1} parent=0
    _
  %s8 = ssub.s32 1, %s6
  %s9 = scalar_select 0, %s8, %s6
  $region1: #{ffn_forward.1} parent=0
    #allocation2 [shape = 'u8[32768]{0}', space=vmem, size = 0x8000, scoped, tag = 'input window, operand 1, single buffered']
    #allocation3 [shape = 's32[1]{0}', space=sflag, size = 0x4, scoped, tag = 'scoped memory for ffn_forward.1']
    #allocation4 [shape = 'u8[32768]{0}', space=vmem, size = 0x8000, scoped, tag = 'input window, operand 3, single buffered']
    #allocation5 [shape = 's32[1]{0}', space=sflag, size = 0x4, scoped, tag = 'scoped memory for ffn_forward.1']
    %10 = vsyncpa [#allocation3], 0
    %11 = vsyncpa [#allocation5], 0
    // Predicated region
    $region2: #{ffn_forward.1} parent=1 // pred_check
      _
    $region3: #{ffn_forward.1} parent=1 // pred_check_branch
      %13 = sbr.rel (0) target = $region5
    $region4: #{ffn_forward.1} parent=1 // pred_region
      _
    $region5: #{ffn_forward.1} parent=1 // pred_fallthru
      _
    // Predicated region
    $region6: #{ffn_forward.1} parent=1 // pred_check
      _
    $region7: #{ffn_forward.1} parent=1 // pred_check_branch
      %15 = sbr.rel (0) target = $region9
    $region8: #{ffn_forward.1} parent=1 // pred_region
      %s17 = ssub.s32 1024, 1024
      %18 = vsyncadd [#allocation3], %s17
      %s19 = sshll.u32 [#allocation2], 4
      %s20 = int_to_ptr.vmem [resolvable:$true] %s19
      %25 = dma.hbm_to_vmem [thread:$0]  %s1, 1024, %s20, [#allocation3], 64, 64, 4
    $region9: #{ffn_forward.1} parent=1 // pred_fallthru
      _
    // Predicated region
    $region10: #{ffn_forward.1} parent=1 // pred_check
      _
    $region11: #{ffn_forward.1} parent=1 // pred_check_branch
      %27 = sbr.rel (0) target = $region13
    $region12: #{ffn_forward.1} parent=1 // pred_region
      _
    $region13: #{ffn_forward.1} parent=1 // pred_fallthru
      _
    // Predicated region
    $region14: #{ffn_forward.1} parent=1 // pred_check
      _
    $region15: #{ffn_forward.1} parent=1 // pred_check_branch
      %29 = sbr.rel (0) target = $region17
    $region16: #{ffn_forward.1} parent=1 // pred_region
      %s31 = ssub.s32 1024, 1024
      %32 = vsyncadd [#allocation5], %s31
      %s33 = sshll.u32 [#allocation4], 4
      %s34 = int_to_ptr.vmem [resolvable:$true] %s33
      %39 = dma.hbm_to_vmem [thread:$0]  %s3, 1024, %s34, [#allocation5], 64, 64, 4
    $region17: #{ffn_forward.1} parent=1 // pred_fallthru
      _
    // Predicated region
    $region18: #{ffn_forward.1} parent=1 // pred_check
      _
    $region19: #{ffn_forward.1} parent=1 // pred_check_branch
      %41 = sbr.rel (0) target = $region21
    $region20: #{ffn_forward.1} parent=1 // pred_region
      _
    $region21: #{ffn_forward.1} parent=1 // pred_fallthru
      _
    // Predicated region
    $region22: #{ffn_forward.1} parent=1 // pred_check
      _
    $region23: #{ffn_forward.1} parent=1 // pred_check_branch
      %43 = sbr.rel (0) target = $region25
    $region24: #{ffn_forward.1} parent=1 // pred_region
      %44 = dma.done [#allocation3], 1024
    $region25: #{ffn_forward.1} parent=1 // pred_fallthru
      _
    // Predicated region
    $region26: #{ffn_forward.1} parent=1 // pred_check
      _
    $region27: #{ffn_forward.1} parent=1 // pred_check_branch
      %46 = sbr.rel (0) target = $region29
    $region28: #{ffn_forward.1} parent=1 // pred_region
      %47 = dma.done [#allocation5], 1024
    $region29: #{ffn_forward.1} parent=1 // pred_fallthru
      _
    %v49 = vld [vmem:[%s0] sm:$0xf]
    %v50 = vld [vmem:[%s0 + $0x4] sm:$0xf]
    %v51 = vld [vmem:[#allocation2] sm:$0xf]
    %v52 = vld [vmem:[#allocation2 + $0x4] sm:$0xf]
    %v53 = vld [vmem:[#allocation2 + $0x8] sm:$0xf]
    %v54 = vld [vmem:[#allocation2 + $0xc] sm:$0xf]
    %v55 = vld [vmem:[#allocation2 + $0x10] sm:$0xf]
    %v56 = vld [vmem:[#allocation2 + $0x14] sm:$0xf]
    %v57 = vld [vmem:[#allocation2 + $0x18] sm:$0xf]
    %v58 = vld [vmem:[#allocation2 + $0x1c] sm:$0xf]
    %v59 = vld [vmem:[#allocation2 + $0x20] sm:$0xf]
    %v60 = vld [vmem:[#allocation2 + $0x24] sm:$0xf]
    %v61 = vld [vmem:[#allocation2 + $0x28] sm:$0xf]
    %v62 = vld [vmem:[#allocation2 + $0x2c] sm:$0xf]
    %v63 = vld [vmem:[#allocation2 + $0x30] sm:$0xf]
    %v64 = vld [vmem:[#allocation2 + $0x34] sm:$0xf]
    %v65 = vld [vmem:[#allocation2 + $0x38] sm:$0xf]
    %v66 = vld [vmem:[#allocation2 + $0x3c] sm:$0xf]
    %v67 = vld [vmem:[%s2] sm:$0x1]
    %v69 = vlaneseq
    %v70 = vshrl.u32 %v69, 7
    %v71 = vsub.s32 0, %v70
    %v72 = vrot.slane %v67, %v71
    %v76 = vunpack.c.l.b16 %v49
    %v77 = vunpack.c.l.b16 %v50
    %v78 = vpack.c.b16 %v77, %v76
    %v96 = vunpack.c.l.b16 %v51
    %v97 = vunpack.c.l.b16 %v52
    %v98 = vunpack.c.l.b16 %v53
    %v99 = vunpack.c.l.b16 %v54
    %v100 = vunpack.c.l.b16 %v55
    %v101 = vunpack.c.l.b16 %v56
    %v102 = vunpack.c.l.b16 %v57
    %v103 = vunpack.c.l.b16 %v58
    %v104 = vunpack.c.l.b16 %v59
    %v105 = vunpack.c.l.b16 %v60
    %v106 = vunpack.c.l.b16 %v61
    %v107 = vunpack.c.l.b16 %v62
    %v108 = vunpack.c.l.b16 %v63
    %v109 = vunpack.c.l.b16 %v64
    %v110 = vunpack.c.l.b16 %v65
    %v111 = vunpack.c.l.b16 %v66
    %v112 = vpack.c.b16 %v97, %v96
    %v113 = vpack.c.b16 %v99, %v98
    %v114 = vpack.c.b16 %v101, %v100
    %v115 = vpack.c.b16 %v103, %v102
    %v116 = vpack.c.b16 %v105, %v104
    %v117 = vpack.c.b16 %v107, %v106
    %v118 = vpack.c.b16 %v109, %v108
    %v119 = vpack.c.b16 %v111, %v110
    %128 = vmatprep.subr.bf16.mxu0 0
    %129 = vmatpush1.bf16.msra.mxu0 %v119
    %130 = vmatprep.subr.bf16.mxu0 0
    %131 = vmatpush1.bf16.msra.mxu0 %v118
    %132 = vmatprep.subr.bf16.mxu0 0
    %133 = vmatpush1.bf16.msra.mxu0 %v117
    %134 = vmatprep.subr.bf16.mxu0 0
    %135 = vmatpush1.bf16.msra.mxu0 %v116
    %136 = vmatprep.subr.bf16.mxu0 0
    %137 = vmatpush1.bf16.msra.mxu0 %v115
    %138 = vmatprep.subr.bf16.mxu0 0
    %139 = vmatpush1.bf16.msra.mxu0 %v114
    %140 = vmatprep.subr.bf16.mxu0 0
    %141 = vmatpush1.bf16.msra.mxu0 %v113
    %142 = vmatprep.subr.bf16.mxu0 0
    %143 = vmatpush1.bf16.msra.mxu0 %v112
    %144 = vmatprep.subr.bf16.mxu0 0
    %145 = vmatpush2.bf16.msra.mxu0 0
    %146 = vmatprep.subr.bf16.mxu0 0
    %147 = vmatpush2.bf16.msra.mxu0 0
    %148 = vmatprep.subr.bf16.mxu0 0
    %149 = vmatpush2.bf16.msra.mxu0 0
    %150 = vmatprep.subr.bf16.mxu0 0
    %151 = vmatpush2.bf16.msra.mxu0 0
    %152 = vmatprep.subr.bf16.mxu0 0
    %153 = vmatpush2.bf16.msra.mxu0 0
    %154 = vmatprep.subr.bf16.mxu0 0
    %155 = vmatpush2.bf16.msra.mxu0 0
    %156 = vmatprep.subr.bf16.mxu0 0
    %157 = vmatpush2.bf16.msra.mxu0 0
    %158 = vmatprep.subr.bf16.mxu0 0
    %159 = vmatpush2.bf16.msra.mxu0 0
    %160 = vmatprep.mubr.bf16.mxu0 0
    %161 = vmatmul.mubr.bf16.gmra.mxu0 %v78
    %v162 = vpop.f32.mrf.mxu0
    %v163 = vadd.f32 %v72, %v162
    %v164 = vpop.f32.mrf.mxu0
    %v165 = vpop.f32.mrf.mxu0
    %v166 = vadd.f32 %v72, %v165
    %v167 = vpop.f32.mrf.mxu0
    %168 = vdwg.mxu0
    %v169 = vmax.f32 %v163, 0.0
    %v170 = vmax.f32 %v166, 0.0
    %v171 = vpack.c.bf16 %v170, %v169
    %v172 = vld [vmem:[#allocation4] sm:$0xf]
    %v173 = vld [vmem:[#allocation4 + $0x4] sm:$0xf]
    %v174 = vld [vmem:[#allocation4 + $0x8] sm:$0xf]
    %v175 = vld [vmem:[#allocation4 + $0xc] sm:$0xf]
    %v176 = vld [vmem:[#allocation4 + $0x10] sm:$0xf]
    %v177 = vld [vmem:[#allocation4 + $0x14] sm:$0xf]
    %v178 = vld [vmem:[#allocation4 + $0x18] sm:$0xf]
    %v179 = vld [vmem:[#allocation4 + $0x1c] sm:$0xf]
    %v180 = vld [vmem:[#allocation4 + $0x20] sm:$0xf]
    %v181 = vld [vmem:[#allocation4 + $0x24] sm:$0xf]
    %v182 = vld [vmem:[#allocation4 + $0x28] sm:$0xf]
    %v183 = vld [vmem:[#allocation4 + $0x2c] sm:$0xf]
    %v184 = vld [vmem:[#allocation4 + $0x30] sm:$0xf]
    %v185 = vld [vmem:[#allocation4 + $0x34] sm:$0xf]
    %v186 = vld [vmem:[#allocation4 + $0x38] sm:$0xf]
    %v187 = vld [vmem:[#allocation4 + $0x3c] sm:$0xf]
    %v188 = vld [vmem:[%s4] sm:$0x1]
    %v190 = vlaneseq
    %v191 = vshrl.u32 %v190, 7
    %v192 = vsub.s32 0, %v191
    %v193 = vrot.slane %v188, %v192
    %v211 = vunpack.c.l.b16 %v172
    %v212 = vunpack.c.l.b16 %v173
    %v213 = vunpack.c.l.b16 %v174
    %v214 = vunpack.c.l.b16 %v175
    %v215 = vunpack.c.l.b16 %v176
    %v216 = vunpack.c.l.b16 %v177
    %v217 = vunpack.c.l.b16 %v178
    %v218 = vunpack.c.l.b16 %v179
    %v219 = vunpack.c.l.b16 %v180
    %v220 = vunpack.c.l.b16 %v181
    %v221 = vunpack.c.l.b16 %v182
    %v222 = vunpack.c.l.b16 %v183
    %v223 = vunpack.c.l.b16 %v184
    %v224 = vunpack.c.l.b16 %v185
    %v225 = vunpack.c.l.b16 %v186
    %v226 = vunpack.c.l.b16 %v187
    %v227 = vpack.c.b16 %v212, %v211
    %v228 = vpack.c.b16 %v214, %v213
    %v229 = vpack.c.b16 %v216, %v215
    %v230 = vpack.c.b16 %v218, %v217
    %v231 = vpack.c.b16 %v220, %v219
    %v232 = vpack.c.b16 %v222, %v221
    %v233 = vpack.c.b16 %v224, %v223
    %v234 = vpack.c.b16 %v226, %v225
    %243 = vmatprep.subr.bf16.mxu0 0
    %244 = vmatpush1.bf16.msra.mxu0 %v234
    %245 = vmatprep.subr.bf16.mxu0 0
    %246 = vmatpush1.bf16.msra.mxu0 %v233
    %247 = vmatprep.subr.bf16.mxu0 0
    %248 = vmatpush1.bf16.msra.mxu0 %v232
    %249 = vmatprep.subr.bf16.mxu0 0
    %250 = vmatpush1.bf16.msra.mxu0 %v231
    %251 = vmatprep.subr.bf16.mxu0 0
    %252 = vmatpush1.bf16.msra.mxu0 %v230
    %253 = vmatprep.subr.bf16.mxu0 0
    %254 = vmatpush1.bf16.msra.mxu0 %v229
    %255 = vmatprep.subr.bf16.mxu0 0
    %256 = vmatpush1.bf16.msra.mxu0 %v228
    %257 = vmatprep.subr.bf16.mxu0 0
    %258 = vmatpush1.bf16.msra.mxu0 %v227
    %259 = vmatprep.subr.bf16.mxu0 0
    %260 = vmatpush2.bf16.msra.mxu0 0
    %261 = vmatprep.subr.bf16.mxu0 0
    %262 = vmatpush2.bf16.msra.mxu0 0
    %263 = vmatprep.subr.bf16.mxu0 0
    %264 = vmatpush2.bf16.msra.mxu0 0
    %265 = vmatprep.subr.bf16.mxu0 0
    %266 = vmatpush2.bf16.msra.mxu0 0
    %267 = vmatprep.subr.bf16.mxu0 0
    %268 = vmatpush2.bf16.msra.mxu0 0
    %269 = vmatprep.subr.bf16.mxu0 0
    %270 = vmatpush2.bf16.msra.mxu0 0
    %271 = vmatprep.subr.bf16.mxu0 0
    %272 = vmatpush2.bf16.msra.mxu0 0
    %273 = vmatprep.subr.bf16.mxu0 0
    %274 = vmatpush2.bf16.msra.mxu0 0
    %275 = vmatprep.mubr.bf16.mxu0 0
    %276 = vmatmul.mubr.bf16.gmra.mxu0 %v171
    %v277 = vpop.f32.mrf.mxu0
    %v278 = vadd.f32 %v193, %v277
    %v279 = vpop.f32.mrf.mxu0
    %v280 = vpop.f32.mrf.mxu0
    %v281 = vadd.f32 %v193, %v280
    %v282 = vpop.f32.mrf.mxu0
    %283 = vdwg.mxu0
    %284 = vst [vmem:[%s5] sm:$0xff] %v278
    %285 = vst [vmem:[%s5 + $0x8] sm:$0xff] %v281
    // Predicated region
    $region30: #{ffn_forward.1} parent=1 // pred_check
      _
    $region31: #{ffn_forward.1} parent=1 // pred_check_branch
      %287 = sbr.rel (0) target = $region33
    $region32: #{ffn_forward.1} parent=1 // pred_region
      _
    $region33: #{ffn_forward.1} parent=1 // pred_fallthru
      _
    // Predicated region
    $region34: #{ffn_forward.1} parent=1 // pred_check
      _
    $region35: #{ffn_forward.1} parent=1 // pred_check_branch
      %289 = sbr.rel (0) target = $region37
    $region36: #{ffn_forward.1} parent=1 // pred_region
      _
    $region37: #{ffn_forward.1} parent=1 // pred_fallthru
      _
    %290 = vsyncpa [#allocation3], 1
    %291 = vsyncpa [#allocation5], 1

</llo_original>
